<compile_context>
chip_gen: v7x
topology: tpu7x:2x2x1
jax: 0.10.0
libtpu: 0.0.40
codegen_flags: <defaults>
</compile_context>

<pallas_src>
import jax
import jax.numpy as jnp
from jax.experimental import pallas as pl
from jax.experimental.pallas import tpu as pltpu


def mlp_kernel(x_ref, w1_ref, bw_ref, b2_ref, o_ref):
    # Layer 1 on the MXU: (B,10) @ (10,5), f32 accumulation; bias row (bw[0])
    # added on the VPU (one vadd), then ReLU.
    h = jnp.dot(x_ref[...], w1_ref[...], preferred_element_type=jnp.float32)
    h = jnp.maximum(h + bw_ref[0:1, :], 0.0)                      # (B, 5)
    # Layer 2 on the VPU/XLU: broadcast multiply by the fc2 weight row (bw[1])
    # + lane reduce; bias from the SMEM scalar. Avoids a second MXU fill/drain.
    y = jnp.sum(h * bw_ref[1:2, :], axis=-1, keepdims=True) + b2_ref[0, 0]
    o_ref[...] = y.astype(o_ref.dtype)


@jax.jit
def simple_model_forward(x, w1, b1, w2, b2):
    B = x.shape[0]
    out_dim = w2.shape[1]

    # Pack the two (1,5) parameter rows into one VMEM operand (param-side only,
    # 40 bytes); x is passed through untouched.
    bw = jnp.concatenate([b1, w2.T], axis=0)     # (2, 5): row 0 = b1, row 1 = w2^T
    b2_s = b2.reshape(1, 1)                      # SMEM scalar

    return pl.pallas_call(
        mlp_kernel,
        out_shape=jax.ShapeDtypeStruct((B, out_dim), jnp.float32),
        in_specs=[
            pl.BlockSpec(memory_space=pltpu.MemorySpace.VMEM),   # x      (B, 10)
            pl.BlockSpec(memory_space=pltpu.MemorySpace.VMEM),   # w1     (10, 5)
            pl.BlockSpec(memory_space=pltpu.MemorySpace.VMEM),   # [b1; w2^T] (2, 5)
            pl.BlockSpec(memory_space=pltpu.MemorySpace.SMEM),   # b2 scalar (1, 1)
        ],
        out_specs=pl.BlockSpec(memory_space=pltpu.MemorySpace.VMEM),
    )(x, w1, bw, b2_s)


if __name__ == "__main__":
    key = jax.random.PRNGKey(0)
    k_x, k_w1, k_b1, k_w2, k_b2 = jax.random.split(key, 5)

    B, D_IN, D_HID, D_OUT = 8, 10, 5, 1

    # Deterministic synthetic parameters (PyTorch-style uniform init bounds).
    x = jax.random.normal(k_x, (B, D_IN), dtype=jnp.float32)
    bound1 = 1.0 / (D_IN ** 0.5)
    w1 = jax.random.uniform(k_w1, (D_IN, D_HID), minval=-bound1, maxval=bound1,
                            dtype=jnp.float32)
    b1 = jax.random.uniform(k_b1, (1, D_HID), minval=-bound1, maxval=bound1,
                            dtype=jnp.float32)
    bound2 = 1.0 / (D_HID ** 0.5)
    w2 = jax.random.uniform(k_w2, (D_HID, D_OUT), minval=-bound2, maxval=bound2,
                            dtype=jnp.float32)
    b2 = jax.random.uniform(k_b2, (1, D_OUT), minval=-bound2, maxval=bound2,
                            dtype=jnp.float32)

    out = simple_model_forward(x, w1, b1, w2, b2)
    out = jax.block_until_ready(out)

    # Pure-JAX reference check (same semantics as the PyTorch module).
    ref = jnp.maximum(x @ w1 + b1, 0.0) @ w2 + b2
    assert out.shape == (B, D_OUT)
    assert jnp.allclose(out, ref, atol=1e-5, rtol=1e-5)

    print("KERNEL_OK")
</pallas_src>

<mosaic_0001>
module attributes {stable_mosaic.version = 11 : i64} {
  func.func @mlp_kernel(%arg0: memref<8x10xf32, #tpu.memory_space<vmem>>, %arg1: memref<10x5xf32, #tpu.memory_space<vmem>>, %arg2: memref<2x5xf32, #tpu.memory_space<vmem>>, %arg3: memref<1x1xf32, #tpu.memory_space<smem>>, %arg4: memref<8x1xf32, #tpu.memory_space<vmem>>) attributes {dimension_semantics = [], scalar_prefetch = 0 : i64, scratch_operands = 0 : i64, tpu.core_type = #tpu.core_type<tc>} {
    %c0 = arith.constant 0 : index
    %c0_0 = arith.constant 0 : index
    %0 = vector.load %arg0[%c0, %c0_0] : memref<8x10xf32, #tpu.memory_space<vmem>>, vector<8x10xf32>
    %c0_1 = arith.constant 0 : index
    %c0_2 = arith.constant 0 : index
    %1 = vector.load %arg1[%c0_1, %c0_2] : memref<10x5xf32, #tpu.memory_space<vmem>>, vector<10x5xf32>
    %cst = arith.constant dense<0.000000e+00> : vector<8x5xf32>
    %2 = tpu.matmul %0, %1, %cst {dimension_numbers = #tpu.dot_dimension_numbers<[1], [0], [0], [1], [0, 0, 1, 1], [], []>} : vector<8x10xf32>, vector<10x5xf32>, vector<8x5xf32> -> vector<8x5xf32>
    %c0_3 = arith.constant 0 : index
    %c0_4 = arith.constant 0 : index
    %3 = vector.load %arg2[%c0_3, %c0_4] : memref<2x5xf32, #tpu.memory_space<vmem>>, vector<1x5xf32>
    %4 = vector.broadcast %3 : vector<1x5xf32> to vector<8x5xf32>
    %5 = arith.addf %2, %4 : vector<8x5xf32>
    %cst_5 = arith.constant 0.000000e+00 : f32
    %6 = vector.broadcast %cst_5 : f32 to vector<8x5xf32>
    %7 = arith.maximumf %5, %6 : vector<8x5xf32>
    %c1 = arith.constant 1 : index
    %c0_6 = arith.constant 0 : index
    %8 = vector.load %arg2[%c1, %c0_6] : memref<2x5xf32, #tpu.memory_space<vmem>>, vector<1x5xf32>
    %9 = vector.broadcast %8 : vector<1x5xf32> to vector<8x5xf32>
    %10 = arith.mulf %7, %9 : vector<8x5xf32>
    %cst_7 = arith.constant dense<0.000000e+00> : vector<8xf32>
    %11 = vector.multi_reduction <add>, %10, %cst_7 [1] : vector<8x5xf32> to vector<8xf32>
    %12 = vector.shape_cast %11 : vector<8xf32> to vector<8x1xf32>
    %c0_8 = arith.constant 0 : index
    %c0_9 = arith.constant 0 : index
    %13 = memref.load %arg3[%c0_8, %c0_9] : memref<1x1xf32, #tpu.memory_space<smem>>
    %14 = vector.broadcast %13 : f32 to vector<8x1xf32>
    %15 = arith.addf %12, %14 : vector<8x1xf32>
    %c0_10 = arith.constant 0 : index
    %c0_11 = arith.constant 0 : index
    %16 = vector.load %arg4[%c0_10, %c0_11] : memref<8x1xf32, #tpu.memory_space<vmem>>, vector<8x1xf32>
    tpu.vector_store %arg4[%c0_10, %c0_11], %15 {strides = array<i32>} : memref<8x1xf32, #tpu.memory_space<vmem>>, vector<8x1xf32>,
    return
  }
}

</mosaic_0001>

<llo_original>
// kernel: simple_model_forward.1
$region0: #{simple_model_forward.1}
  #allocation0 [shape = 'u32[]', space=smem, size = 0x4, offset = 0x4, fixed_abs, tag = 'smem constant byte address 0x4 - core index']
  #allocation1 [shape = 'u32[144,128]{1,0:T(1,128)}', space=vmem, size = 0x12000, scoped, tag = 'internal scratch']
  #allocation2 [shape = 'f32[1,1]{1,0:T(1,128)S(6)}', space=smem, size = 0x200, scoped, tag = 'scoped memory for simple_model_forward.1']
  %s0 = inlined_call_operand.vmem [shape: f32[8,10], index: 0, kind: input, shape index: {}]
  %s1 = inlined_call_operand.vmem [shape: f32[10,5], index: 1, kind: input, shape index: {}]
  %s2 = inlined_call_operand.vmem [shape: f32[2,5], index: 2, kind: input, shape index: {}]
  %s3 = inlined_call_operand.<no memory space> [shape: f32[1,1], index: 3, kind: input, shape index: {}]
  %s4 = inlined_call_operand.vmem [shape: f32[8,1], index: 4, kind: output, shape index: {}]
  %s5 = sld [smem:[#allocation0]]
  $region26: #{simple_model_forward.1} parent=0
    _
  %s7 = ssub.s32 1, %s5
  %s8 = scalar_select 0, %s7, %s5
  %9 = sst [smem:[#allocation2]] %s3
  // Predicated region
  $region2: #{simple_model_forward.1} parent=0 // pred_check
    _
  $region3: #{simple_model_forward.1} parent=0 // pred_check_branch
    %11 = sbr.rel (0) target = $region5
  $region4: #{simple_model_forward.1} parent=0 // pred_region
    _
  $region5: #{simple_model_forward.1} parent=0 // pred_fallthru
    _
  // Predicated region
  $region6: #{simple_model_forward.1} parent=0 // pred_check
    _
  $region7: #{simple_model_forward.1} parent=0 // pred_check_branch
    %13 = sbr.rel (0) target = $region9
  $region8: #{simple_model_forward.1} parent=0 // pred_region
    _
  $region9: #{simple_model_forward.1} parent=0 // pred_fallthru
    _
  // Predicated region
  $region10: #{simple_model_forward.1} parent=0 // pred_check
    _
  $region11: #{simple_model_forward.1} parent=0 // pred_check_branch
    %15 = sbr.rel (0) target = $region13
  $region12: #{simple_model_forward.1} parent=0 // pred_region
    _
  $region13: #{simple_model_forward.1} parent=0 // pred_fallthru
    _
  // Predicated region
  $region14: #{simple_model_forward.1} parent=0 // pred_check
    _
  $region15: #{simple_model_forward.1} parent=0 // pred_check_branch
    %17 = sbr.rel (0) target = $region17
  $region16: #{simple_model_forward.1} parent=0 // pred_region
    _
  $region17: #{simple_model_forward.1} parent=0 // pred_fallthru
    _
  %v18 = vld [vmem:[%s0] sm:$0xff]
  %v19 = vld [vmem:[%s1] sm:$0xff]
  %v20 = vld [vmem:[%s1 + $0x8] sm:$0x3]
  %v21 = vld [vmem:[%s2] sm:$0x1]
  %v22 = vlaneseq
  %v23 = vshrl.u32 %v22, 7
  %v24 = vsub.s32 0, %v23
  %v25 = vrot.slane %v21, %v24
  %vm26 = vcmask 80896
  %v28 = vsel %vm26, %v18, 0
  %vm30 = vcmask 1041408
  %v32 = vsel %vm30, %v20, 0
  %34 = vmatprep.subr.mxu0 0.0
  %35 = vmatpush1.msra.mxu0 %v19
  %36 = vmatprep.subr.mxu0 0.0
  %37 = vmatpush1.msra.mxu0 %v32
  %38 = vmatprep.subr.mxu0 0.0
  %39 = vmatpush1.msra.mxu0 0.0
  %40 = vmatprep.subr.mxu0 0.0
  %41 = vmatpush1.msra.mxu0 0.0
  %42 = vmatprep.subr.mxu0 0.0
  %43 = vmatpush1.msra.mxu0 0.0
  %44 = vmatprep.subr.mxu0 0.0
  %45 = vmatpush1.msra.mxu0 0.0
  %46 = vmatprep.subr.mxu0 0.0
  %47 = vmatpush1.msra.mxu0 0.0
  %48 = vmatprep.subr.mxu0 0.0
  %49 = vmatpush1.msra.mxu0 0.0
  %50 = vmatprep.subr.mxu0 0.0
  %51 = vmatpush1.msra.mxu0 0.0
  %52 = vmatprep.subr.mxu0 0.0
  %53 = vmatpush1.msra.mxu0 0.0
  %54 = vmatprep.subr.mxu0 0.0
  %55 = vmatpush1.msra.mxu0 0.0
  %56 = vmatprep.subr.mxu0 0.0
  %57 = vmatpush1.msra.mxu0 0.0
  %58 = vmatprep.subr.mxu0 0.0
  %59 = vmatpush1.msra.mxu0 0.0
  %60 = vmatprep.subr.mxu0 0.0
  %61 = vmatpush1.msra.mxu0 0.0
  %62 = vmatprep.subr.mxu0 0.0
  %63 = vmatpush1.msra.mxu0 0.0
  %64 = vmatprep.subr.mxu0 0.0
  %65 = vmatpush1.msra.mxu0 0.0
  %66 = vmatprep.subr.mxu0 0.0
  %67 = vmatpush1.msra.mxu0 0.0
  %68 = vmatprep.subr.mxu0 0.0
  %69 = vmatpush1.msra.mxu0 0.0
  %70 = vmatprep.subr.mxu0 0.0
  %71 = vmatpush1.msra.mxu0 0.0
  %72 = vmatprep.subr.mxu0 0.0
  %73 = vmatpush1.msra.mxu0 0.0
  %74 = vmatprep.subr.mxu0 0.0
  %75 = vmatpush1.msra.mxu0 0.0
  %76 = vmatprep.subr.mxu0 0.0
  %77 = vmatpush1.msra.mxu0 0.0
  %78 = vmatprep.subr.mxu0 0.0
  %79 = vmatpush1.msra.mxu0 0.0
  %80 = vmatprep.subr.mxu0 0.0
  %81 = vmatpush1.msra.mxu0 0.0
  %82 = vmatprep.subr.mxu0 0.0
  %83 = vmatpush1.msra.mxu0 0.0
  %84 = vmatprep.subr.mxu0 0.0
  %85 = vmatpush1.msra.mxu0 0.0
  %86 = vmatprep.subr.mxu0 0.0
  %87 = vmatpush1.msra.mxu0 0.0
  %88 = vmatprep.subr.mxu0 0.0
  %89 = vmatpush1.msra.mxu0 0.0
  %90 = vmatprep.subr.mxu0 0.0
  %91 = vmatpush1.msra.mxu0 0.0
  %92 = vmatprep.subr.mxu0 0.0
  %93 = vmatpush1.msra.mxu0 0.0
  %94 = vmatprep.subr.mxu0 0.0
  %95 = vmatpush1.msra.mxu0 0.0
  %96 = vmatprep.subr.mxu0 0.0
  %97 = vmatpush1.msra.mxu0 0.0
  %98 = vmatprep.mubr.f32.mxu0 0.0
  %99 = vmatmul.mubr.f32.gmra.mrb[0].mxu0 %v28
  %v100 = vpop.f32.mrb[0].mxu0
  %v101 = vadd.f32 %v25, %v100
  %v102 = vpop.f32.mrb[0].mxu0
  %103 = vdwg.mxu0
  %v104 = vmax.f32 %v101, 0.0
  %v105 = vld [vmem:[%s2 + $0x1] sm:$0x1]
  %v106 = vlaneseq
  %v107 = vshrl.u32 %v106, 7
  %v108 = vsub.s32 0, %v107
  %v109 = vrot.slane %v105, %v108
  %v110 = vmul.f32 %v104, %v109
  %vm111 = vcmask 39936
  %v112 = vsel %vm111, %v110, 0.0
  %113 = vadd.xlane.f32.xlu0 %v112
  %v114 = vpop.xlane.xlu0 %113
  %s115 = sld [smem:[#allocation2]]
  %v116 = vstv %s115
  %v117 = vadd.f32 %v114, %v116
  %vm118 = vcmask 7168
  %119 = vst.msk [vmem:[%s4] sm:$0xff] %vm118, %v117
  // Predicated region
  $region18: #{simple_model_forward.1} parent=0 // pred_check
    _
  $region19: #{simple_model_forward.1} parent=0 // pred_check_branch
    %121 = sbr.rel (0) target = $region21
  $region20: #{simple_model_forward.1} parent=0 // pred_region
    _
  $region21: #{simple_model_forward.1} parent=0 // pred_fallthru
    _
  // Predicated region
  $region22: #{simple_model_forward.1} parent=0 // pred_check
    _
  $region23: #{simple_model_forward.1} parent=0 // pred_check_branch
    %123 = sbr.rel (0) target = $region25
  $region24: #{simple_model_forward.1} parent=0 // pred_region
    _
  $region25: #{simple_model_forward.1} parent=0 // pred_fallthru
    _

</llo_original>
